<compile_context>
chip_gen: v5e
topology: v5e:2x2
jax: 0.10.0
libtpu: 0.0.40
codegen_flags: <defaults>
</compile_context>

<pallas_src>
import functools

import jax
import jax.numpy as jnp
from jax.experimental import pallas as pl
from jax.experimental.pallas import tpu as pltpu

_BN_EPS = 1e-5  # PyTorch nn.BatchNorm2d default


# ----------------------------------------------------------------------------
# Pallas kernels
# ----------------------------------------------------------------------------
def _conv_kernel(x_ref, w_ref, b_ref, *rest, taps, mw, relu, has_res):
    """Tap-accumulated conv block:

    x_ref : (P, L, Cin) bf16  -- P flattened (padded) input planes
    w_ref : (T, Cin, ct) bf16 -- one (Cin, ct) weight slab per tap
    b_ref : (1, ct) f32       -- folded BatchNorm bias
    res   : (1, Lout, ct)     -- optional residual (added before ReLU)
    o_ref : (1, Lout, ct)
    acc   : (Lout, ct) f32 VMEM scratch
    """
    if has_res:
        res_ref, o_ref, acc_ref = rest
    else:
        o_ref, acc_ref = rest
    lout = o_ref.shape[1]

    if len(taps) == 1 and mw == lout:
        # Exact single-tap matmul (1x1 conv / stem im2col / FC).
        p, s = taps[0]
        acc_ref[...] = jnp.dot(x_ref[p, s:s + mw, :], w_ref[0],
                               preferred_element_type=jnp.float32)
    else:
        acc_ref[...] = jnp.zeros_like(acc_ref)
        for t, (p, s) in enumerate(taps):
            acc_ref[0:mw, :] += jnp.dot(x_ref[p, s:s + mw, :], w_ref[t],
                                        preferred_element_type=jnp.float32)

    r = acc_ref[...] + b_ref[...]
    if has_res:
        r = r + res_ref[0].astype(jnp.float32)
    if relu:
        r = jnp.maximum(r, 0.0)
    o_ref[0] = r.astype(o_ref.dtype)


def _maxpool_kernel(x_ref, o_ref):
    """3x3/stride-2 max pool from 4 parity planes (9 contiguous taps)."""
    _, Ho, Wo, _ = o_ref.shape
    r = None
    for kh in range(3):
        for kw in range(3):
            p = 2 * (kh % 2) + (kw % 2)
            xs = x_ref[p, kh // 2:kh // 2 + Ho, kw // 2:kw // 2 + Wo, :]
            r = xs if r is None else jnp.maximum(r, xs)
    o_ref[0] = r.astype(o_ref.dtype)


def _avgpool_kernel(x_ref, o_ref):
    o_ref[...] = jnp.mean(x_ref[...].astype(jnp.float32), axis=(1, 2))


# ----------------------------------------------------------------------------
# Fused conv wrapper
# ----------------------------------------------------------------------------
def _fused_conv(planes, n_planes, w_taps, bias, taps, lout, mw, *,
                relu, residual=None, out_dtype=jnp.bfloat16):
    """planes: (N*P, L, Cin) bf16; w_taps: (T, Cin, Cout) bf16;
    bias: (1, Cout) f32; residual: (N, lout, Cout) or None.
    Returns (N, lout, Cout)."""
    NP, L, Cin = planes.shape
    Nb = NP // n_planes
    T, _, Cout = w_taps.shape
    ct = 256 if (Cout > 256 and Cout % 256 == 0) else Cout
    n_ct = Cout // ct

    in_specs = [
        pl.BlockSpec((n_planes, L, Cin), lambda n, j: (n, 0, 0)),
        pl.BlockSpec((T, Cin, ct), lambda n, j: (0, 0, j)),
        pl.BlockSpec((1, ct), lambda n, j: (0, j)),
    ]
    inputs = [planes, w_taps, bias]
    if residual is not None:
        in_specs.append(pl.BlockSpec((1, lout, ct), lambda n, j: (n, 0, j)))
        inputs.append(residual)

    out_bytes = Nb * lout * Cout * jnp.dtype(out_dtype).itemsize
    cost = pl.CostEstimate(
        flops=int(2 * Nb * mw * Cin * Cout * T),
        transcendentals=0,
        bytes_accessed=int(sum(a.size * a.dtype.itemsize for a in inputs))
        + int(out_bytes),
    )

    kernel = functools.partial(_conv_kernel, taps=tuple(taps), mw=mw,
                               relu=relu, has_res=residual is not None)
    return pl.pallas_call(
        kernel,
        out_shape=jax.ShapeDtypeStruct((Nb, lout, Cout), out_dtype),
        grid_spec=pltpu.PrefetchScalarGridSpec(
            num_scalar_prefetch=0,
            grid=(Nb, n_ct),
            in_specs=in_specs,
            out_specs=pl.BlockSpec((1, lout, ct), lambda n, j: (n, 0, j)),
            scratch_shapes=[pltpu.VMEM((lout, ct), jnp.float32)],
        ),
        compiler_params=pltpu.CompilerParams(
            dimension_semantics=("parallel", "parallel"),
            vmem_limit_bytes=48 * 1024 * 1024),
        cost_estimate=cost,
    )(*inputs)


@functools.partial(jax.jit, static_argnames=("stride", "padding", "relu"))
def conv_bn_act(x, w_oihw, gamma, beta, mean, var, residual=None, *,
                stride, padding, relu):
    """Conv2d (no bias) + folded eval BatchNorm + optional residual + ReLU.

    x: NHWC, w_oihw: (Cout, Cin, Kh, Kw) PyTorch layout.
    residual (optional, 1x1 convs only): NHWC tensor added before ReLU.
    """
    scale = gamma / jnp.sqrt(var + _BN_EPS)                 # (Cout,)
    w = jnp.transpose(w_oihw, (2, 3, 1, 0)) * scale         # (Kh,Kw,Cin,Cout)
    bias = (beta - mean * scale).reshape(1, -1).astype(jnp.float32)

    N, H, W, Cin = x.shape
    Kh, Kw, _, Cout = w.shape
    Ho = (H + 2 * padding - Kh) // stride + 1
    Wo = (W + 2 * padding - Kw) // stride + 1

    xb = x.astype(jnp.bfloat16)
    wb = w.astype(jnp.bfloat16)

    if Kh == 1 and Kw == 1:
        # 1x1 conv: pure channel matmul (spatial subsample first if strided).
        xs = xb if stride == 1 else xb[:, ::stride, ::stride, :]
        planes = xs.reshape(N, Ho * Wo, Cin)
        n_planes = 1
        taps = ((0, 0),)
        w_taps = wb.reshape(1, Cin, Cout)
        lout = mw = Ho * Wo
        w_out = Wo
    elif Cin < 32:
        # Stem 7x7: Kh*Kw*Cin is tiny, so im2col glue is cheap and yields one
        # well-shaped MXU matmul.
        xp = jnp.pad(xb, ((0, 0), (padding, padding), (padding, padding), (0, 0)))
        pats = [xp[:, kh:kh + stride * (Ho - 1) + 1:stride,
                   kw:kw + stride * (Wo - 1) + 1:stride, :]
                for kh in range(Kh) for kw in range(Kw)]
        planes = jnp.stack(pats, axis=3).reshape(N, Ho * Wo, Kh * Kw * Cin)
        n_planes = 1
        taps = ((0, 0),)
        w_taps = wb.reshape(1, Kh * Kw * Cin, Cout)
        lout = mw = Ho * Wo
        w_out = Wo
    elif stride == 1:
        # KxK stride-1 conv: taps are contiguous row-ranges of the flattened
        # padded plane (no im2col in HBM).
        Wh = W + 2 * padding
        Hh = H + 2 * padding
        xp = jnp.pad(xb, ((0, 0), (padding, padding), (padding, padding), (0, 0)))
        planes = xp.reshape(N, Hh * Wh, Cin)
        n_planes = 1
        taps = tuple((0, kh * Wh + kw) for kh in range(Kh) for kw in range(Kw))
        w_taps = wb.reshape(Kh * Kw, Cin, Cout)
        mw = (Ho - 1) * Wh + Wo
        lout = Ho * Wh
        w_out = Wh
    else:
        # KxK stride-2 conv: 4-way parity (space-to-depth) decomposition so
        # every tap is again a contiguous row-range.
        assert stride == 2, "only strides 1 and 2 are used by ResNet-101"
        Hpp = (Kh - 1) // 2 + Ho
        Wpp = (Kw - 1) // 2 + Wo
        xp = jnp.pad(xb, ((0, 0),
                          (padding, 2 * Hpp - H - padding),
                          (padding, 2 * Wpp - W - padding),
                          (0, 0)))
        planes = (xp.reshape(N, Hpp, 2, Wpp, 2, Cin)
                  .transpose(0, 2, 4, 1, 3, 5)
                  .reshape(N * 4, Hpp * Wpp, Cin))
        n_planes = 4
        taps = tuple((2 * (kh % 2) + (kw % 2), (kh // 2) * Wpp + (kw // 2))
                     for kh in range(Kh) for kw in range(Kw))
        w_taps = wb.reshape(Kh * Kw, Cin, Cout)
        mw = (Ho - 1) * Wpp + Wo
        lout = Ho * Wpp
        w_out = Wpp

    res = None
    if residual is not None:
        assert w_out == Wo, "residual fusion only supported for 1x1 convs"
        res = residual.astype(jnp.bfloat16).reshape(N, Ho * Wo, Cout)

    out = _fused_conv(planes, n_planes, w_taps, bias, taps, lout, mw,
                      relu=relu, residual=res)
    out = out.reshape(N, Ho, w_out, Cout)
    if w_out != Wo:
        out = out[:, :, :Wo, :]
    return out


@jax.jit
def maxpool_3x3_s2(x):
    """MaxPool2d(kernel_size=3, stride=2, padding=1) on NHWC input."""
    N, H, W, C = x.shape
    Ho = (H - 1) // 2 + 1
    Wo = (W - 1) // 2 + 1
    Hpp, Wpp = Ho + 1, Wo + 1
    xp = jnp.pad(x, ((0, 0), (1, 2 * Hpp - H - 1), (1, 2 * Wpp - W - 1), (0, 0)),
                 constant_values=-jnp.inf)
    planes = (xp.reshape(N, Hpp, 2, Wpp, 2, C)
              .transpose(0, 2, 4, 1, 3, 5)
              .reshape(N * 4, Hpp, Wpp, C))
    return pl.pallas_call(
        _maxpool_kernel,
        out_shape=jax.ShapeDtypeStruct((N, Ho, Wo, C), x.dtype),
        grid_spec=pltpu.PrefetchScalarGridSpec(
            num_scalar_prefetch=0,
            grid=(N,),
            in_specs=[pl.BlockSpec((4, Hpp, Wpp, C), lambda n: (n, 0, 0, 0))],
            out_specs=pl.BlockSpec((1, Ho, Wo, C), lambda n: (n, 0, 0, 0)),
        ),
        compiler_params=pltpu.CompilerParams(
            dimension_semantics=("parallel",),
            vmem_limit_bytes=48 * 1024 * 1024),
    )(planes)


@jax.jit
def global_avgpool(x):
    """AdaptiveAvgPool2d((1,1)) on NHWC input -> (N, C) float32."""
    N, H, W, C = x.shape
    return pl.pallas_call(
        _avgpool_kernel,
        out_shape=jax.ShapeDtypeStruct((N, C), jnp.float32),
        grid_spec=pltpu.PrefetchScalarGridSpec(
            num_scalar_prefetch=0,
            grid=(N,),
            in_specs=[pl.BlockSpec((1, H, W, C), lambda n: (n, 0, 0, 0))],
            out_specs=pl.BlockSpec((1, C), lambda n: (n, 0)),
        ),
        compiler_params=pltpu.CompilerParams(
            dimension_semantics=("parallel",)),
    )(x)


@jax.jit
def linear(x, w, b):
    """x:(N,K) @ w:(K,C) + b -> f32 logits, via the fused conv kernel."""
    N, K = x.shape
    C = w.shape[1]
    planes = x.astype(jnp.bfloat16).reshape(1, N, K)
    w_taps = w.astype(jnp.bfloat16).reshape(1, K, C)
    bias = b.reshape(1, C).astype(jnp.float32)
    out = _fused_conv(planes, 1, w_taps, bias, ((0, 0),), N, N,
                      relu=False, out_dtype=jnp.float32)
    return out.reshape(N, C)


# ----------------------------------------------------------------------------
# ResNet-101 (torchvision architecture: Bottleneck blocks [3, 4, 23, 3])
# ----------------------------------------------------------------------------
def make_resnet101_params(key, num_classes):
    blocks_per_layer = [3, 4, 23, 3]
    widths = [64, 128, 256, 512]
    expansion = 4
    counter = [0]

    def nk():
        counter[0] += 1
        return jax.random.fold_in(key, counter[0])

    def conv_w(cout, cin, k):
        fan_in = cin * k * k
        return (jax.random.normal(nk(), (cout, cin, k, k), jnp.float32)
                * jnp.sqrt(2.0 / fan_in))

    def bn_p(c):
        # Deterministic eval-mode BatchNorm statistics/affine parameters.
        return {"gamma": jnp.ones((c,), jnp.float32),
                "beta": jnp.zeros((c,), jnp.float32),
                "mean": jnp.zeros((c,), jnp.float32),
                "var": jnp.ones((c,), jnp.float32)}

    params = {"conv1_w": conv_w(64, 3, 7), "bn1": bn_p(64)}

    layers = []
    inplanes = 64
    for li, (nblocks, planes) in enumerate(zip(blocks_per_layer, widths)):
        layer_stride = 1 if li == 0 else 2
        blocks = []
        for bi in range(nblocks):
            s = layer_stride if bi == 0 else 1
            blk = {
                "stride": s,
                "conv1_w": conv_w(planes, inplanes, 1), "bn1": bn_p(planes),
                "conv2_w": conv_w(planes, planes, 3), "bn2": bn_p(planes),
                "conv3_w": conv_w(planes * expansion, planes, 1),
                "bn3": bn_p(planes * expansion),
            }
            if bi == 0:  # projection shortcut (1x1 conv + BN)
                blk["down_w"] = conv_w(planes * expansion, inplanes, 1)
                blk["down_bn"] = bn_p(planes * expansion)
            blocks.append(blk)
            inplanes = planes * expansion
        layers.append(blocks)
    params["layers"] = layers

    fc_in = 512 * expansion  # 2048
    params["fc_w"] = (jax.random.normal(nk(), (num_classes, fc_in), jnp.float32)
                      / jnp.sqrt(fc_in))
    params["fc_b"] = jnp.zeros((num_classes,), jnp.float32)
    return params


def _bn(d):
    return d["gamma"], d["beta"], d["mean"], d["var"]


def bottleneck(blk, x):
    s = blk["stride"]
    out = conv_bn_act(x, blk["conv1_w"], *_bn(blk["bn1"]),
                      stride=1, padding=0, relu=True)
    out = conv_bn_act(out, blk["conv2_w"], *_bn(blk["bn2"]),
                      stride=s, padding=1, relu=True)
    if "down_w" in blk:
        identity = conv_bn_act(x, blk["down_w"], *_bn(blk["down_bn"]),
                               stride=s, padding=0, relu=False)
    else:
        identity = x
    # conv3 with the residual add + ReLU fused into its matmul epilogue.
    return conv_bn_act(out, blk["conv3_w"], *_bn(blk["bn3"]), identity,
                       stride=1, padding=0, relu=True)


def resnet101_forward(params, x_nchw):
    """Equivalent of ResNet101(num_classes).forward(x) (eval mode)."""
    x = jnp.transpose(x_nchw, (0, 2, 3, 1))  # NCHW -> NHWC
    x = conv_bn_act(x, params["conv1_w"], *_bn(params["bn1"]),
                    stride=2, padding=3, relu=True)
    x = maxpool_3x3_s2(x)
    for blocks in params["layers"]:
        for blk in blocks:
            x = bottleneck(blk, x)
    pooled = global_avgpool(x)                               # (N, 2048) f32
    logits = linear(pooled, params["fc_w"].T, params["fc_b"])
    return logits


if __name__ == "__main__":
    key = jax.random.PRNGKey(0)
    pkey, xkey = jax.random.split(key)

    num_classes = 10
    params = make_resnet101_params(pkey, num_classes)

    x = jax.random.normal(xkey, (2, 3, 32, 32), jnp.float32)  # NCHW like PyTorch
    logits = resnet101_forward(params, x)
    logits = jax.block_until_ready(logits)

    assert logits.shape == (2, num_classes), logits.shape
    assert bool(jnp.all(jnp.isfinite(logits)))
    print("KERNEL_OK")
</pallas_src>

<mosaic_0001>
module attributes {stable_mosaic.version = 11 : i64} {
  func.func @_conv_kernel(%arg0: i32, %arg1: i32, %arg2: memref<1x256x147xbf16, #tpu.memory_space<vmem>>, %arg3: memref<1x147x64xbf16, #tpu.memory_space<vmem>>, %arg4: memref<1x64xf32, #tpu.memory_space<vmem>>, %arg5: memref<1x256x64xbf16, #tpu.memory_space<vmem>>, %arg6: memref<256x64xf32, #tpu.memory_space<vmem>>) attributes {dimension_semantics = [#tpu.dimension_semantics<parallel>, #tpu.dimension_semantics<parallel>], iteration_bounds = array<i64: 2, 1>, scalar_prefetch = 0 : i64, scratch_operands = 1 : i64, tpu.core_type = #tpu.core_type<tc>, window_params = [{transform_indices = @transform_0, window_bounds = array<i64: 1, 256, 147>}, {transform_indices = @transform_1, window_bounds = array<i64: 1, 147, 64>}, {transform_indices = @transform_2, window_bounds = array<i64: 1, 64>}, {transform_indices = @transform_3, window_bounds = array<i64: 1, 256, 64>}]} {
    %c0 = arith.constant 0 : index
    %c0_0 = arith.constant 0 : index
    %c0_1 = arith.constant 0 : index
    %0 = vector.load %arg2[%c0, %c0_0, %c0_1] : memref<1x256x147xbf16, #tpu.memory_space<vmem>>, vector<1x256x147xbf16>
    %1 = vector.shape_cast %0 : vector<1x256x147xbf16> to vector<256x147xbf16>
    %c0_2 = arith.constant 0 : index
    %c0_3 = arith.constant 0 : index
    %c0_4 = arith.constant 0 : index
    %2 = vector.load %arg3[%c0_2, %c0_3, %c0_4] : memref<1x147x64xbf16, #tpu.memory_space<vmem>>, vector<1x147x64xbf16>
    %3 = vector.shape_cast %2 : vector<1x147x64xbf16> to vector<147x64xbf16>
    %cst = arith.constant dense<0.000000e+00> : vector<256x64xf32>
    %4 = tpu.matmul %1, %3, %cst {dimension_numbers = #tpu.dot_dimension_numbers<[1], [0], [0], [1], [0, 0, 1, 1], [], []>} : vector<256x147xbf16>, vector<147x64xbf16>, vector<256x64xf32> -> vector<256x64xf32>
    %c0_5 = arith.constant 0 : index
    %c0_6 = arith.constant 0 : index
    %5 = vector.load %arg6[%c0_5, %c0_6] : memref<256x64xf32, #tpu.memory_space<vmem>>, vector<256x64xf32>
    tpu.vector_store %arg6[%c0_5, %c0_6], %4 {strides = array<i32>} : memref<256x64xf32, #tpu.memory_space<vmem>>, vector<256x64xf32>,
    %c0_7 = arith.constant 0 : index
    %c0_8 = arith.constant 0 : index
    %6 = vector.load %arg6[%c0_7, %c0_8] : memref<256x64xf32, #tpu.memory_space<vmem>>, vector<256x64xf32>
    %c0_9 = arith.constant 0 : index
    %c0_10 = arith.constant 0 : index
    %7 = vector.load %arg4[%c0_9, %c0_10] : memref<1x64xf32, #tpu.memory_space<vmem>>, vector<1x64xf32>
    %8 = vector.broadcast %7 : vector<1x64xf32> to vector<256x64xf32>
    %9 = arith.addf %6, %8 : vector<256x64xf32>
    %cst_11 = arith.constant 0.000000e+00 : f32
    %10 = vector.broadcast %cst_11 : f32 to vector<256x64xf32>
    %11 = arith.maximumf %9, %10 : vector<256x64xf32>
    %12 = arith.truncf %11 : vector<256x64xf32> to vector<256x64xbf16>
    %c0_12 = arith.constant 0 : index
    %c0_13 = arith.constant 0 : index
    %c0_14 = arith.constant 0 : index
    %13 = vector.load %arg5[%c0_12, %c0_13, %c0_14] : memref<1x256x64xbf16, #tpu.memory_space<vmem>>, vector<1x256x64xbf16>
    %14 = vector.shape_cast %13 : vector<1x256x64xbf16> to vector<256x64xbf16>
    %15 = vector.shape_cast %12 : vector<256x64xbf16> to vector<1x256x64xbf16>
    tpu.vector_store %arg5[%c0_12, %c0_13, %c0_14], %15 {strides = array<i32>} : memref<1x256x64xbf16, #tpu.memory_space<vmem>>, vector<1x256x64xbf16>,
    return
  }
  func.func @transform_0(%arg0: i32, %arg1: i32) -> (i32, i32, i32) {
    %c0_i32 = arith.constant 0 : i32
    %c0_i32_0 = arith.constant 0 : i32
    %c0_i32_1 = arith.constant 0 : i32
    return %arg0, %c0_i32, %c0_i32_0 : i32, i32, i32
  }
  func.func @transform_1(%arg0: i32, %arg1: i32) -> (i32, i32, i32) {
    %c0_i32 = arith.constant 0 : i32
    %c0_i32_0 = arith.constant 0 : i32
    %c0_i32_1 = arith.constant 0 : i32
    return %c0_i32, %c0_i32_0, %arg1 : i32, i32, i32
  }
  func.func @transform_2(%arg0: i32, %arg1: i32) -> (i32, i32) {
    %c0_i32 = arith.constant 0 : i32
    %c0_i32_0 = arith.constant 0 : i32
    return %c0_i32, %arg1 : i32, i32
  }
  func.func @transform_3(%arg0: i32, %arg1: i32) -> (i32, i32, i32) {
    %c0_i32 = arith.constant 0 : i32
    %c0_i32_0 = arith.constant 0 : i32
    return %arg0, %c0_i32, %arg1 : i32, i32, i32
  }
}

</mosaic_0001>

<llo_original>
// kernel: conv_bn_act.1
$region0: #{conv_bn_act.1}
  #allocation0 [shape = 'u32[]', space=smem, size = 0x4, offset = 0x4, fixed_abs, tag = 'smem constant byte address 0x4 - core index']
  #allocation1 [shape = 'u32[72,128]{1,0:T(1,128)}', space=vmem, size = 0x9000, scoped, tag = 'internal scratch']
  #allocation2 [shape = 'f32[256,64]{1,0:T(8,128)}', space=vmem, size = 0x20000, scoped, tag = 'scratch operand']
  %s0 = inlined_call_operand.vmem [shape: bf16[2,256,147], index: 0, kind: input, shape index: {}]
  %s1 = inlined_call_operand.vmem [shape: bf16[1,147,64], index: 1, kind: input, shape index: {}]
  %s2 = inlined_call_operand.vmem [shape: f32[1,64], index: 2, kind: input, shape index: {}]
  %s3 = inlined_call_operand.hbm [shape: bf16[2,256,64], index: 3, kind: output, shape index: {}]
  %s4 = sld [smem:[#allocation0]]
  $region45: #{conv_bn_act.1} parent=0
    _
  %s6 = ssub.s32 1, %s4
  %s7 = scalar_select 0, %s6, %s4
  $region1: #{conv_bn_act.1} parent=0
    #allocation3 [shape = 'u8[131072]{0}', space=vmem, size = 0x20000, scoped, tag = 'output window, operand 0']
    #allocation4 [shape = 's32[2]{0}', space=sflag, size = 0x8, scoped, tag = 'scoped memory for conv_bn_act.1']
    %8 = vsyncpa [#allocation4], 0
    %s9 = scalar_lea.sflag [#allocation4], 1
    %10 = vsyncpa %s9, 0
    loop: start=0, step=1, limit=4
    $region2: #{conv_bn_act.1} parent=1 // loop_pre_header
      _
    $region3: #{conv_bn_act.1} parent=1 // loop_header
      %s12 = sphi 0, %s16
      %p13 = scmp.ge.s32.totalorder %s12, 4
      %s19 = sphi 0, %s31
      %s20 = sphi 0, %s27
      %s21 = sphi 0, %s19
      %s22 = sphi 0, %s20
      %s23 = sphi 0, %s21
      %s24 = sphi 0, %s22
      %s34 = sphi 0, %s36
      %s37 = sphi 0, %s34
      %s38 = sphi 0, %s37
      %s54 = sphi 0, %s38
      %s60 = sphi 0, %s62
      %s63 = sphi 0, %s60
      %s64 = sphi 0, %s63
      %s80 = sphi 0, %s64
      %s86 = sphi 0, %s88
      %s89 = sphi 0, %s86
      %s90 = sphi 0, %s89
      %s106 = sphi 0, %s90
      %s114 = sphi 0, %s116
      %s117 = sphi 0, %s114
      %s118 = sphi 0, %s117
      %s134 = sphi 0, %s118
    $region4: #{conv_bn_act.1} parent=1 // loop_header_branch
      %15 = sbr.rel (%p13) target = $region8
    $region5: #{conv_bn_act.1} parent=1 // loop_body
      %s17 = ssub.s32 %s12, 1
      %s18 = ssub.s32 %s12, 2
      %s25 = sadd.s32 1, %s20
      %p26 = scmp.ge.s32.totalorder %s25, 1
      %s27 = scalar_select %p26, 0, %s25
      %s28 = sadd.s32 1, %s19
      %s29 = scalar_select %p26, %s28, %s19
      %p30 = scmp.ge.s32.totalorder %s29, 2
      %s31 = scalar_select %p30, 0, %s29
      %s32 = ssub.s32 %s19, %s31
      %p33 = scmp.eq.s32.totalorder %s32, 0
      %s35 = sadd.s32 %s34, 1
      %s36 = scalar_select %p33, %s34, %s35
      %p39 = pneg %p33
      %p40 = scmp.eq.s32.totalorder %s12, 1
      %p41 = por %p39, %p40
      %p42 = scmp.ne.s32.totalorder %s34, %s37
      %p43 = scmp.eq.s32.totalorder %s12, 0
      %p44 = por %p42, %p43
      %p45 = scmp.ne.s32.totalorder %s34, %s37
      %p46 = scmp.eq.s32.totalorder %s17, 1
      %p47 = por %p45, %p46
      %p48 = scmp.ne.s32.totalorder %s37, %s38
      %p49 = scmp.eq.s32.totalorder %s17, 0
      %p50 = por %p48, %p49
      %p51 = scmp.ne.s32.totalorder %s37, %s38
      %p52 = scmp.eq.s32.totalorder %s18, 1
      %p53 = por %p51, %p52
      %p55 = scmp.ne.s32.totalorder %s38, %s54
      %p56 = scmp.eq.s32.totalorder %s18, 0
      %p57 = por %p55, %p56
      %s58 = ssub.s32 %s20, %s27
      %p59 = scmp.eq.s32.totalorder %s58, 0
      %s61 = sadd.s32 %s60, 1
      %s62 = scalar_select %p59, %s60, %s61
      %p65 = pneg %p59
      %p66 = scmp.eq.s32.totalorder %s12, 1
      %p67 = por %p65, %p66
      %p68 = scmp.ne.s32.totalorder %s60, %s63
      %p69 = scmp.eq.s32.totalorder %s12, 0
      %p70 = por %p68, %p69
      %p71 = scmp.ne.s32.totalorder %s60, %s63
      %p72 = scmp.eq.s32.totalorder %s17, 1
      %p73 = por %p71, %p72
      %p74 = scmp.ne.s32.totalorder %s63, %s64
      %p75 = scmp.eq.s32.totalorder %s17, 0
      %p76 = por %p74, %p75
      %p77 = scmp.ne.s32.totalorder %s63, %s64
      %p78 = scmp.eq.s32.totalorder %s18, 1
      %p79 = por %p77, %p78
      %p81 = scmp.ne.s32.totalorder %s64, %s80
      %p82 = scmp.eq.s32.totalorder %s18, 0
      %p83 = por %p81, %p82
      %s84 = ssub.s32 %s20, %s27
      %p85 = scmp.eq.s32.totalorder %s84, 0
      %s87 = sadd.s32 %s86, 1
      %s88 = scalar_select %p85, %s86, %s87
      %p91 = pneg %p85
      %p92 = scmp.eq.s32.totalorder %s12, 1
      %p93 = por %p91, %p92
      %p94 = scmp.ne.s32.totalorder %s86, %s89
      %p95 = scmp.eq.s32.totalorder %s12, 0
      %p96 = por %p94, %p95
      %p97 = scmp.ne.s32.totalorder %s86, %s89
      %p98 = scmp.eq.s32.totalorder %s17, 1
      %p99 = por %p97, %p98
      %p100 = scmp.ne.s32.totalorder %s89, %s90
      %p101 = scmp.eq.s32.totalorder %s17, 0
      %p102 = por %p100, %p101
      %p103 = scmp.ne.s32.totalorder %s89, %s90
      %p104 = scmp.eq.s32.totalorder %s18, 1
      %p105 = por %p103, %p104
      %p107 = scmp.ne.s32.totalorder %s90, %s106
      %p108 = scmp.eq.s32.totalorder %s18, 0
      %p109 = por %p107, %p108
      %s110 = ssub.s32 %s19, %s31
      %s111 = ssub.s32 %s20, %s27
      %s112 = sor.u32 %s110, %s111
      %p113 = scmp.eq.s32.totalorder %s112, 0
      %s115 = sadd.s32 %s114, 1
      %s116 = scalar_select %p113, %s114, %s115
      %p119 = pneg %p113
      %p120 = scmp.eq.s32.totalorder %s12, 1
      %p121 = por %p119, %p120
      %p122 = scmp.ne.s32.totalorder %s114, %s117
      %p123 = scmp.eq.s32.totalorder %s12, 0
      %p124 = por %p122, %p123
      %p125 = scmp.ne.s32.totalorder %s114, %s117
      %p126 = scmp.eq.s32.totalorder %s17, 1
      %p127 = por %p125, %p126
      %p128 = scmp.ne.s32.totalorder %s117, %s118
      %p129 = scmp.eq.s32.totalorder %s17, 0
      %p130 = por %p128, %p129
      %p131 = scmp.ne.s32.totalorder %s117, %s118
      %p132 = scmp.eq.s32.totalorder %s18, 1
      %p133 = por %p131, %p132
      %p135 = scmp.ne.s32.totalorder %s118, %s134
      %p136 = scmp.eq.s32.totalorder %s18, 0
      %p137 = por %p135, %p136
      %p138 = scmp.le.s32.totalorder 1, %s12
      %p139 = scmp.lt.s32.totalorder %s12, 3
      %p140 = pnand %p138, %p139
      %p141 = pneg %p140
      // Predicated region
      $region9: #{conv_bn_act.1} parent=5 // pred_check
        _
      $region10: #{conv_bn_act.1} parent=5 // pred_check_branch
        %143 = sbr.rel (%p140) target = $region12
      $region11: #{conv_bn_act.1} parent=5 // pred_region
        %s144 = ssub.s32 %s12, 1
        // Predicated region
        $region13: #{conv_bn_act.1} parent=11 // pred_check
          %p145 = pneg %p76
        $region14: #{conv_bn_act.1} parent=11 // pred_check_branch
          %147 = sbr.rel (%p145) target = $region16
        $region15: #{conv_bn_act.1} parent=11 // pred_region
          %p148 = scmp.lt.s32.totalorder %s22, 0
          %s149 = scalar_select %p148, %s22, 0
          %s150 = smul.addr %s149, 4
          %s151 = scalar_lea.vmem %s1, %s150
        $region16: #{conv_bn_act.1} parent=11 // pred_fallthru
          _
        // Predicated region
        $region17: #{conv_bn_act.1} parent=11 // pred_check
          %p152 = pneg %p102
        $region18: #{conv_bn_act.1} parent=11 // pred_check_branch
          %154 = sbr.rel (%p152) target = $region20
        $region19: #{conv_bn_act.1} parent=11 // pred_region
          %p155 = scmp.lt.s32.totalorder %s22, 0
          %s156 = scalar_select %p155, %s22, 0
          %s157 = scalar_lea.vmem %s2, %s156
        $region20: #{conv_bn_act.1} parent=11 // pred_fallthru
          _
      $region12: #{conv_bn_act.1} parent=5 // pred_fallthru
        _
      %p158 = scmp.lt.s32.totalorder %s12, 2
      // Predicated region
      $region21: #{conv_bn_act.1} parent=5 // pred_check
        %p159 = pneg %p158
      $region22: #{conv_bn_act.1} parent=5 // pred_check_branch
        %161 = sbr.rel (%p159) target = $region24
      $region23: #{conv_bn_act.1} parent=5 // pred_region
        // Predicated region
        $region25: #{conv_bn_act.1} parent=23 // pred_check
          %p162 = pneg %p44
        $region26: #{conv_bn_act.1} parent=23 // pred_check_branch
          %164 = sbr.rel (%p162) target = $region28
        $region27: #{conv_bn_act.1} parent=23 // pred_region
          %p165 = scmp.lt.s32.totalorder %s19, 1
          %s166 = scalar_select %p165, %s19, 1
          %s167 = smul.addr %s166, 64
          %s168 = smul.addr %s167, 4
          %s169 = scalar_lea.vmem %s0, %s168
        $region28: #{conv_bn_act.1} parent=23 // pred_fallthru
          _
      $region24: #{conv_bn_act.1} parent=5 // pred_fallthru
        _
      %p170 = scmp.le.s32.totalorder 1, %s12
      %p171 = scmp.lt.s32.totalorder %s12, 3
      %p172 = pnand %p170, %p171
      %p173 = pneg %p172
      // Predicated region
      $region29: #{conv_bn_act.1} parent=5 // pred_check
        _
      $region30: #{conv_bn_act.1} parent=5 // pred_check_branch
        %175 = sbr.rel (%p172) target = $region32
      $region31: #{conv_bn_act.1} parent=5 // pred_region
        %s176 = ssub.s32 %s12, 1
        %p177 = scmp.lt.s32.totalorder %s21, 1
        %s178 = scalar_select %p177, %s21, 1
        %s179 = smul.addr %s178, 64
        %s180 = smul.addr %s179, 4
        %s181 = scalar_lea.vmem %s0, %s180
        %p182 = pneg %p50
        %p183 = pneg %p47
        %p184 = scmp.lt.s32.totalorder %s22, 0
        %s185 = scalar_select %p184, %s22, 0
        %s186 = smul.addr %s185, 4
        %s187 = scalar_lea.vmem %s1, %s186
        %p188 = pneg %p76
        %p189 = pneg %p73
        %p190 = scmp.lt.s32.totalorder %s22, 0
        %s191 = scalar_select %p190, %s22, 0
        %s192 = scalar_lea.vmem %s2, %s191
        %p193 = pneg %p102
        %p194 = pneg %p99
        %p195 = pneg %p130
        %p196 = pneg %p127
        %s197 = sand.u32 %s117, 1
        %s198 = scalar_lea.sflag [#allocation4], %s197
        %s199 = sand.u32 %s117, 1
        %s200 = smul.addr %s199, 128
        %s201 = scalar_lea.vmem [#allocation3], %s200
        %p202 = scmp.lt.s32.totalorder %s21, 1
        %s203 = scalar_select %p202, %s21, 1
        %s204 = smul.addr %s203, 64
        %s205 = smul.addr %s204, 4
        %s206 = scalar_lea.vmem %s0, %s205
        %p207 = scmp.lt.s32.totalorder %s22, 0
        %s208 = scalar_select %p207, %s22, 0
        %s209 = smul.addr %s208, 4
        %s210 = scalar_lea.vmem %s1, %s209
        %p211 = scmp.lt.s32.totalorder %s22, 0
        %s212 = scalar_select %p211, %s22, 0
        %s213 = scalar_lea.vmem %s2, %s212
        %v215 = vld [vmem:[%s206] sm:$0xff]
        %v216 = vld [vmem:[%s206 + $0x8] sm:$0xff]
        %v217 = vld [vmem:[%s206 + $0x10] sm:$0xff]
        %v218 = vld [vmem:[%s206 + $0x18] sm:$0xff]
        %v219 = vld [vmem:[%s206 + $0x20] sm:$0xff]
        %v220 = vld [vmem:[%s206 + $0x28] sm:$0xff]
        %v221 = vld [vmem:[%s206 + $0x30] sm:$0xff]
        %v222 = vld [vmem:[%s206 + $0x38] sm:$0xff]
        %v223 = vld [vmem:[%s206 + $0x40] sm:$0xff]
        %v224 = vld [vmem:[%s206 + $0x48] sm:$0xff]
        %v225 = vld [vmem:[%s206 + $0x50] sm:$0xff]
        %v226 = vld [vmem:[%s206 + $0x58] sm:$0xff]
        %v227 = vld [vmem:[%s206 + $0x60] sm:$0xff]
        %v228 = vld [vmem:[%s206 + $0x68] sm:$0xff]
        %v229 = vld [vmem:[%s206 + $0x70] sm:$0xff]
        %v230 = vld [vmem:[%s206 + $0x78] sm:$0xff]
        %v231 = vld [vmem:[%s206 + $0x80] sm:$0xff]
        %v232 = vld [vmem:[%s206 + $0x88] sm:$0xff]
        %v233 = vld [vmem:[%s206 + $0x90] sm:$0xff]
        %v234 = vld [vmem:[%s206 + $0x98] sm:$0xff]
        %v235 = vld [vmem:[%s206 + $0xa0] sm:$0xff]
        %v236 = vld [vmem:[%s206 + $0xa8] sm:$0xff]
        %v237 = vld [vmem:[%s206 + $0xb0] sm:$0xff]
        %v238 = vld [vmem:[%s206 + $0xb8] sm:$0xff]
        %v239 = vld [vmem:[%s206 + $0xc0] sm:$0xff]
        %v240 = vld [vmem:[%s206 + $0xc8] sm:$0xff]
        %v241 = vld [vmem:[%s206 + $0xd0] sm:$0xff]
        %v242 = vld [vmem:[%s206 + $0xd8] sm:$0xff]
        %v243 = vld [vmem:[%s206 + $0xe0] sm:$0xff]
        %v244 = vld [vmem:[%s206 + $0xe8] sm:$0xff]
        %v245 = vld [vmem:[%s206 + $0xf0] sm:$0xff]
        %v246 = vld [vmem:[%s206 + $0xf8] sm:$0xff]
        %v247 = vld [vmem:[%s210] sm:$0xf]
        %v248 = vld [vmem:[%s210 + $0x4] sm:$0xf]
        %v249 = vld [vmem:[%s210 + $0x8] sm:$0xf]
        %v250 = vld [vmem:[%s210 + $0xc] sm:$0xf]
        %v251 = vld [vmem:[%s210 + $0x10] sm:$0xf]
        %v252 = vld [vmem:[%s210 + $0x14] sm:$0xf]
        %v253 = vld [vmem:[%s210 + $0x18] sm:$0xf]
        %v254 = vld [vmem:[%s210 + $0x1c] sm:$0xf]
        %v255 = vld [vmem:[%s210 + $0x20] sm:$0xf]
        %v256 = vld [vmem:[%s210 + $0x24] sm:$0xf]
        %v257 = vld [vmem:[%s210 + $0x28] sm:$0xf]
        %v258 = vld [vmem:[%s210 + $0x2c] sm:$0xf]
        %v259 = vld [vmem:[%s210 + $0x30] sm:$0xf]
        %v260 = vld [vmem:[%s210 + $0x34] sm:$0xf]
        %v261 = vld [vmem:[%s210 + $0x38] sm:$0xf]
        %v262 = vld [vmem:[%s210 + $0x3c] sm:$0xf]
        %v263 = vld [vmem:[%s210 + $0x40] sm:$0xf]
        %v264 = vld [vmem:[%s210 + $0x44] sm:$0xf]
        %v265 = vld [vmem:[%s210 + $0x48] sm:$0x3]
        %v298 = vunpack.c.l.b16 %v215
        %v299 = vunpack.c.h.b16 %v215
        %v300 = vunpack.c.l.b16 %v216
        %v301 = vunpack.c.h.b16 %v216
        %v302 = vunpack.c.l.b16 %v217
        %v303 = vunpack.c.h.b16 %v217
        %v304 = vunpack.c.l.b16 %v218
        %v305 = vunpack.c.h.b16 %v218
        %v306 = vunpack.c.l.b16 %v219
        %v307 = vunpack.c.h.b16 %v219
        %v308 = vunpack.c.l.b16 %v220
        %v309 = vunpack.c.h.b16 %v220
        %v310 = vunpack.c.l.b16 %v221
        %v311 = vunpack.c.h.b16 %v221
        %v312 = vunpack.c.l.b16 %v222
        %v313 = vunpack.c.h.b16 %v222
        %v314 = vunpack.c.l.b16 %v223
        %v315 = vunpack.c.h.b16 %v223
        %v316 = vunpack.c.l.b16 %v224
        %v317 = vunpack.c.h.b16 %v224
        %v318 = vunpack.c.l.b16 %v225
        %v319 = vunpack.c.h.b16 %v225
        %v320 = vunpack.c.l.b16 %v226
        %v321 = vunpack.c.h.b16 %v226
        %v322 = vunpack.c.l.b16 %v227
        %v323 = vunpack.c.h.b16 %v227
        %v324 = vunpack.c.l.b16 %v228
        %v325 = vunpack.c.h.b16 %v228
        %v326 = vunpack.c.l.b16 %v229
        %v327 = vunpack.c.h.b16 %v229
        %v328 = vunpack.c.l.b16 %v230
        %v329 = vunpack.c.h.b16 %v230
        %v330 = vunpack.c.l.b16 %v231
        %v331 = vunpack.c.h.b16 %v231
        %v332 = vunpack.c.l.b16 %v232
        %v333 = vunpack.c.h.b16 %v232
        %v334 = vunpack.c.l.b16 %v233
        %v335 = vunpack.c.h.b16 %v233
        %v336 = vunpack.c.l.b16 %v234
        %v337 = vunpack.c.h.b16 %v234
        %v338 = vunpack.c.l.b16 %v235
        %v339 = vunpack.c.h.b16 %v235
        %v340 = vunpack.c.l.b16 %v236
        %v341 = vunpack.c.h.b16 %v236
        %v342 = vunpack.c.l.b16 %v237
        %v343 = vunpack.c.h.b16 %v237
        %v344 = vunpack.c.l.b16 %v238
        %v345 = vunpack.c.h.b16 %v238
        %v346 = vunpack.c.l.b16 %v239
        %v347 = vunpack.c.h.b16 %v239
        %v348 = vunpack.c.l.b16 %v240
        %v349 = vunpack.c.h.b16 %v240
        %v350 = vunpack.c.l.b16 %v241
        %v351 = vunpack.c.h.b16 %v241
        %v352 = vunpack.c.l.b16 %v242
        %v353 = vunpack.c.h.b16 %v242
        %v354 = vunpack.c.l.b16 %v243
        %v355 = vunpack.c.h.b16 %v243
        %v356 = vunpack.c.l.b16 %v244
        %v357 = vunpack.c.h.b16 %v244
        %v358 = vunpack.c.l.b16 %v245
        %v359 = vunpack.c.h.b16 %v245
        %v360 = vunpack.c.l.b16 %v246
        %v361 = vunpack.c.h.b16 %v246
        %v362 = vpack.c.b16 %v300, %v298
        %v363 = vpack.c.b16 %v301, %v299
        %v364 = vpack.c.b16 %v304, %v302
        %v365 = vpack.c.b16 %v305, %v303
        %v366 = vpack.c.b16 %v308, %v306
        %v367 = vpack.c.b16 %v309, %v307
        %v368 = vpack.c.b16 %v312, %v310
        %v369 = vpack.c.b16 %v313, %v311
        %v370 = vpack.c.b16 %v316, %v314
        %v371 = vpack.c.b16 %v317, %v315
        %v372 = vpack.c.b16 %v320, %v318
        %v373 = vpack.c.b16 %v321, %v319
        %v374 = vpack.c.b16 %v324, %v322
        %v375 = vpack.c.b16 %v325, %v323
        %v376 = vpack.c.b16 %v328, %v326
        %v377 = vpack.c.b16 %v329, %v327
        %v378 = vpack.c.b16 %v332, %v330
        %v379 = vpack.c.b16 %v333, %v331
        %v380 = vpack.c.b16 %v336, %v334
        %v381 = vpack.c.b16 %v337, %v335
        %v382 = vpack.c.b16 %v340, %v338
        %v383 = vpack.c.b16 %v341, %v339
        %v384 = vpack.c.b16 %v344, %v342
        %v385 = vpack.c.b16 %v345, %v343
        %v386 = vpack.c.b16 %v348, %v346
        %v387 = vpack.c.b16 %v349, %v347
        %v388 = vpack.c.b16 %v352, %v350
        %v389 = vpack.c.b16 %v353, %v351
        %v390 = vpack.c.b16 %v356, %v354
        %v391 = vpack.c.b16 %v357, %v355
        %v392 = vpack.c.b16 %v360, %v358
        %v393 = vpack.c.b16 %v361, %v359
        %v429 = vunpack.c.l.b16 %v247
        %v430 = vunpack.c.l.b16 %v248
        %v431 = vunpack.c.l.b16 %v249
        %v432 = vunpack.c.l.b16 %v250
        %v433 = vunpack.c.l.b16 %v251
        %v434 = vunpack.c.l.b16 %v252
        %v435 = vunpack.c.l.b16 %v253
        %v436 = vunpack.c.l.b16 %v254
        %v437 = vunpack.c.l.b16 %v255
        %v438 = vunpack.c.l.b16 %v256
        %v439 = vunpack.c.l.b16 %v257
        %v440 = vunpack.c.l.b16 %v258
        %v441 = vunpack.c.l.b16 %v259
        %v442 = vunpack.c.l.b16 %v260
        %v443 = vunpack.c.l.b16 %v261
        %v444 = vunpack.c.l.b16 %v262
        %v445 = vunpack.c.l.b16 %v263
        %v446 = vunpack.c.l.b16 %v264
        %v447 = vunpack.c.l.b16 %v265
        %v448 = vpack.c.b16 %v430, %v429
        %v449 = vpack.c.b16 %v432, %v431
        %v450 = vpack.c.b16 %v434, %v433
        %v451 = vpack.c.b16 %v436, %v435
        %v452 = vpack.c.b16 %v438, %v437
        %v453 = vpack.c.b16 %v440, %v439
        %v454 = vpack.c.b16 %v442, %v441
        %v455 = vpack.c.b16 %v444, %v443
        %v456 = vpack.c.b16 %v446, %v445
        %v457 = vpack.c.b16 %v447, %v447
        %vm467 = vcmask 154624
        %v469 = vsel %vm467, %v363, 0
        %v472 = vsel %vm467, %v365, 0
        %v475 = vsel %vm467, %v367, 0
        %v478 = vsel %vm467, %v369, 0
        %v481 = vsel %vm467, %v371, 0
        %v484 = vsel %vm467, %v373, 0
        %v487 = vsel %vm467, %v375, 0
        %v490 = vsel %vm467, %v377, 0
        %v493 = vsel %vm467, %v379, 0
        %v496 = vsel %vm467, %v381, 0
        %v499 = vsel %vm467, %v383, 0
        %v502 = vsel %vm467, %v385, 0
        %v505 = vsel %vm467, %v387, 0
        %v508 = vsel %vm467, %v389, 0
        %v511 = vsel %vm467, %v391, 0
        %v514 = vsel %vm467, %v393, 0
        %vm516 = vcmask 1040384
        %vm517 = vcmask 1041408
        %v518 = vsel %vm516, 4294967295, 65535
        %v519 = vsel %vm517, %v518, 0
        %v521 = vand.u32 %v457, %v519
        %523 = vmatpush.bf16.msra.mxu0 %v455
        %524 = vmatpush.bf16.msra.mxu0 %v454
        %525 = vmatpush.bf16.msra.mxu0 %v453
        %526 = vmatpush.bf16.msra.mxu0 %v452
        %527 = vmatpush.bf16.msra.mxu0 %v451
        %528 = vmatpush.bf16.msra.mxu0 %v450
        %529 = vmatpush.bf16.msra.mxu0 %v449
        %530 = vmatpush.bf16.msra.mxu0 %v448
        %531 = vmatmul.bf16.gmra.mxu0 %v362
        %v532 = vpop.f32.mrf.mxu0
        %v533 = vadd.f32 0.0, %v532
        %v534 = vpop.f32.mrf.mxu0
        %v535 = vadd.f32 0.0, %v534
        %536 = vmatmul.bf16.gmra.mxu0 %v364
        %v537 = vpop.f32.mrf.mxu0
        %v538 = vadd.f32 0.0, %v537
        %v539 = vpop.f32.mrf.mxu0
        %v540 = vadd.f32 0.0, %v539
        %541 = vmatmul.bf16.gmra.mxu0 %v366
        %v542 = vpop.f32.mrf.mxu0
        %v543 = vadd.f32 0.0, %v542
        %v544 = vpop.f32.mrf.mxu0
        %v545 = vadd.f32 0.0, %v544
        %546 = vmatmul.bf16.gmra.mxu0 %v368
        %v547 = vpop.f32.mrf.mxu0
        %v548 = vadd.f32 0.0, %v547
        %v549 = vpop.f32.mrf.mxu0
        %v550 = vadd.f32 0.0, %v549
        %551 = vmatmul.bf16.gmra.mxu0 %v370
        %v552 = vpop.f32.mrf.mxu0
        %v553 = vadd.f32 0.0, %v552
        %v554 = vpop.f32.mrf.mxu0
        %v555 = vadd.f32 0.0, %v554
        %556 = vmatmul.bf16.gmra.mxu0 %v372
        %v557 = vpop.f32.mrf.mxu0
        %v558 = vadd.f32 0.0, %v557
        %v559 = vpop.f32.mrf.mxu0
        %v560 = vadd.f32 0.0, %v559
        %561 = vmatmul.bf16.gmra.mxu0 %v374
        %v562 = vpop.f32.mrf.mxu0
        %v563 = vadd.f32 0.0, %v562
        %v564 = vpop.f32.mrf.mxu0
        %v565 = vadd.f32 0.0, %v564
        %566 = vmatmul.bf16.gmra.mxu0 %v376
        %v567 = vpop.f32.mrf.mxu0
        %v568 = vadd.f32 0.0, %v567
        %v569 = vpop.f32.mrf.mxu0
        %v570 = vadd.f32 0.0, %v569
        %571 = vmatmul.bf16.gmra.mxu0 %v378
        %v572 = vpop.f32.mrf.mxu0
        %v573 = vadd.f32 0.0, %v572
        %v574 = vpop.f32.mrf.mxu0
        %v575 = vadd.f32 0.0, %v574
        %576 = vmatmul.bf16.gmra.mxu0 %v380
        %v577 = vpop.f32.mrf.mxu0
        %v578 = vadd.f32 0.0, %v577
        %v579 = vpop.f32.mrf.mxu0
        %v580 = vadd.f32 0.0, %v579
        %581 = vmatmul.bf16.gmra.mxu0 %v382
        %v582 = vpop.f32.mrf.mxu0
        %v583 = vadd.f32 0.0, %v582
        %v584 = vpop.f32.mrf.mxu0
        %v585 = vadd.f32 0.0, %v584
        %586 = vmatmul.bf16.gmra.mxu0 %v384
        %v587 = vpop.f32.mrf.mxu0
        %v588 = vadd.f32 0.0, %v587
        %v589 = vpop.f32.mrf.mxu0
        %v590 = vadd.f32 0.0, %v589
        %591 = vmatmul.bf16.gmra.mxu0 %v386
        %v592 = vpop.f32.mrf.mxu0
        %v593 = vadd.f32 0.0, %v592
        %v594 = vpop.f32.mrf.mxu0
        %v595 = vadd.f32 0.0, %v594
        %596 = vmatmul.bf16.gmra.mxu0 %v388
        %v597 = vpop.f32.mrf.mxu0
        %v598 = vadd.f32 0.0, %v597
        %v599 = vpop.f32.mrf.mxu0
        %v600 = vadd.f32 0.0, %v599
        %601 = vmatmul.bf16.gmra.mxu0 %v390
        %v602 = vpop.f32.mrf.mxu0
        %v603 = vadd.f32 0.0, %v602
        %v604 = vpop.f32.mrf.mxu0
        %v605 = vadd.f32 0.0, %v604
        %606 = vmatmul.bf16.gmra.mxu0 %v392
        %v607 = vpop.f32.mrf.mxu0
        %v608 = vadd.f32 0.0, %v607
        %v609 = vpop.f32.mrf.mxu0
        %v610 = vadd.f32 0.0, %v609
        %611 = vdwg.mxu0
        %612 = vmatpush.bf16.msra.mxu0 0
        %613 = vmatpush.bf16.msra.mxu0 0
        %614 = vmatpush.bf16.msra.mxu0 0
        %615 = vmatpush.bf16.msra.mxu0 0
        %616 = vmatpush.bf16.msra.mxu0 0
        %617 = vmatpush.bf16.msra.mxu0 0
        %618 = vmatpush.bf16.msra.mxu0 %v521
        %619 = vmatpush.bf16.msra.mxu0 %v456
        %620 = vmatmul.bf16.gmra.mxu0 %v469
        %v621 = vpop.f32.mrf.mxu0
        %v622 = vadd.f32 %v533, %v621
        %v623 = vpop.f32.mrf.mxu0
        %v624 = vadd.f32 %v535, %v623
        %625 = vmatmul.bf16.gmra.mxu0 %v472
        %v626 = vpop.f32.mrf.mxu0
        %v627 = vadd.f32 %v538, %v626
        %v628 = vpop.f32.mrf.mxu0
        %v629 = vadd.f32 %v540, %v628
        %630 = vmatmul.bf16.gmra.mxu0 %v475
        %v631 = vpop.f32.mrf.mxu0
        %v632 = vadd.f32 %v543, %v631
        %v633 = vpop.f32.mrf.mxu0
        %v634 = vadd.f32 %v545, %v633
        %635 = vmatmul.bf16.gmra.mxu0 %v478
        %v636 = vpop.f32.mrf.mxu0
        %v637 = vadd.f32 %v548, %v636
        %v638 = vpop.f32.mrf.mxu0
        %v639 = vadd.f32 %v550, %v638
        %640 = vmatmul.bf16.gmra.mxu0 %v481
        %v641 = vpop.f32.mrf.mxu0
        %v642 = vadd.f32 %v553, %v641
        %v643 = vpop.f32.mrf.mxu0
        %v644 = vadd.f32 %v555, %v643
        %645 = vmatmul.bf16.gmra.mxu0 %v484
        %v646 = vpop.f32.mrf.mxu0
        %v647 = vadd.f32 %v558, %v646
        %v648 = vpop.f32.mrf.mxu0
        %v649 = vadd.f32 %v560, %v648
        %650 = vmatmul.bf16.gmra.mxu0 %v487
        %v651 = vpop.f32.mrf.mxu0
        %v652 = vadd.f32 %v563, %v651
        %v653 = vpop.f32.mrf.mxu0
        %v654 = vadd.f32 %v565, %v653
        %655 = vmatmul.bf16.gmra.mxu0 %v490
        %v656 = vpop.f32.mrf.mxu0
        %v657 = vadd.f32 %v568, %v656
        %v658 = vpop.f32.mrf.mxu0
        %v659 = vadd.f32 %v570, %v658
        %660 = vmatmul.bf16.gmra.mxu0 %v493
        %v661 = vpop.f32.mrf.mxu0
        %v662 = vadd.f32 %v573, %v661
        %v663 = vpop.f32.mrf.mxu0
        %v664 = vadd.f32 %v575, %v663
        %665 = vmatmul.bf16.gmra.mxu0 %v496
        %v666 = vpop.f32.mrf.mxu0
        %v667 = vadd.f32 %v578, %v666
        %v668 = vpop.f32.mrf.mxu0
        %v669 = vadd.f32 %v580, %v668
        %670 = vmatmul.bf16.gmra.mxu0 %v499
        %v671 = vpop.f32.mrf.mxu0
        %v672 = vadd.f32 %v583, %v671
        %v673 = vpop.f32.mrf.mxu0
        %v674 = vadd.f32 %v585, %v673
        %675 = vmatmul.bf16.gmra.mxu0 %v502
        %v676 = vpop.f32.mrf.mxu0
        %v677 = vadd.f32 %v588, %v676
        %v678 = vpop.f32.mrf.mxu0
        %v679 = vadd.f32 %v590, %v678
        %680 = vmatmul.bf16.gmra.mxu0 %v505
        %v681 = vpop.f32.mrf.mxu0
        %v682 = vadd.f32 %v593, %v681
        %v683 = vpop.f32.mrf.mxu0
        %v684 = vadd.f32 %v595, %v683
        %685 = vmatmul.bf16.gmra.mxu0 %v508
        %v686 = vpop.f32.mrf.mxu0
        %v687 = vadd.f32 %v598, %v686
        %v688 = vpop.f32.mrf.mxu0
        %v689 = vadd.f32 %v600, %v688
        %690 = vmatmul.bf16.gmra.mxu0 %v511
        %v691 = vpop.f32.mrf.mxu0
        %v692 = vadd.f32 %v603, %v691
        %v693 = vpop.f32.mrf.mxu0
        %v694 = vadd.f32 %v605, %v693
        %695 = vmatmul.bf16.gmra.mxu0 %v514
        %v696 = vpop.f32.mrf.mxu0
        %v697 = vadd.f32 %v608, %v696
        %v698 = vpop.f32.mrf.mxu0
        %v699 = vadd.f32 %v610, %v698
        %700 = vdwg.mxu0
        %vm701 = vcmask 523264
        %702 = vst.msk [vmem:[#allocation2] sm:$0xff] %vm701, %v622
        %703 = vst.msk [vmem:[#allocation2 + $0x8] sm:$0xff] %vm701, %v624
        %704 = vst.msk [vmem:[#allocation2 + $0x10] sm:$0xff] %vm701, %v627
        %705 = vst.msk [vmem:[#allocation2 + $0x18] sm:$0xff] %vm701, %v629
        %706 = vst.msk [vmem:[#allocation2 + $0x20] sm:$0xff] %vm701, %v632
        %707 = vst.msk [vmem:[#allocation2 + $0x28] sm:$0xff] %vm701, %v634
        %708 = vst.msk [vmem:[#allocation2 + $0x30] sm:$0xff] %vm701, %v637
        %709 = vst.msk [vmem:[#allocation2 + $0x38] sm:$0xff] %vm701, %v639
        %710 = vst.msk [vmem:[#allocation2 + $0x40] sm:$0xff] %vm701, %v642
        %711 = vst.msk [vmem:[#allocation2 + $0x48] sm:$0xff] %vm701, %v644
        %712 = vst.msk [vmem:[#allocation2 + $0x50] sm:$0xff] %vm701, %v647
        %713 = vst.msk [vmem:[#allocation2 + $0x58] sm:$0xff] %vm701, %v649
        %714 = vst.msk [vmem:[#allocation2 + $0x60] sm:$0xff] %vm701, %v652
        %715 = vst.msk [vmem:[#allocation2 + $0x68] sm:$0xff] %vm701, %v654
        %716 = vst.msk [vmem:[#allocation2 + $0x70] sm:$0xff] %vm701, %v657
        %717 = vst.msk [vmem:[#allocation2 + $0x78] sm:$0xff] %vm701, %v659
        %718 = vst.msk [vmem:[#allocation2 + $0x80] sm:$0xff] %vm701, %v662
        %719 = vst.msk [vmem:[#allocation2 + $0x88] sm:$0xff] %vm701, %v664
        %720 = vst.msk [vmem:[#allocation2 + $0x90] sm:$0xff] %vm701, %v667
        %721 = vst.msk [vmem:[#allocation2 + $0x98] sm:$0xff] %vm701, %v669
        %722 = vst.msk [vmem:[#allocation2 + $0xa0] sm:$0xff] %vm701, %v672
        %723 = vst.msk [vmem:[#allocation2 + $0xa8] sm:$0xff] %vm701, %v674
        %724 = vst.msk [vmem:[#allocation2 + $0xb0] sm:$0xff] %vm701, %v677
        %725 = vst.msk [vmem:[#allocation2 + $0xb8] sm:$0xff] %vm701, %v679
        %726 = vst.msk [vmem:[#allocation2 + $0xc0] sm:$0xff] %vm701, %v682
        %727 = vst.msk [vmem:[#allocation2 + $0xc8] sm:$0xff] %vm701, %v684
        %728 = vst.msk [vmem:[#allocation2 + $0xd0] sm:$0xff] %vm701, %v687
        %729 = vst.msk [vmem:[#allocation2 + $0xd8] sm:$0xff] %vm701, %v689
        %730 = vst.msk [vmem:[#allocation2 + $0xe0] sm:$0xff] %vm701, %v692
        %731 = vst.msk [vmem:[#allocation2 + $0xe8] sm:$0xff] %vm701, %v694
        %732 = vst.msk [vmem:[#allocation2 + $0xf0] sm:$0xff] %vm701, %v697
        %733 = vst.msk [vmem:[#allocation2 + $0xf8] sm:$0xff] %vm701, %v699
        %v734 = vld [vmem:[#allocation2] sm:$0xff]
        %v735 = vld [vmem:[#allocation2 + $0x8] sm:$0xff]
        %v736 = vld [vmem:[#allocation2 + $0x10] sm:$0xff]
        %v737 = vld [vmem:[#allocation2 + $0x18] sm:$0xff]
        %v738 = vld [vmem:[#allocation2 + $0x20] sm:$0xff]
        %v739 = vld [vmem:[#allocation2 + $0x28] sm:$0xff]
        %v740 = vld [vmem:[#allocation2 + $0x30] sm:$0xff]
        %v741 = vld [vmem:[#allocation2 + $0x38] sm:$0xff]
        %v742 = vld [vmem:[#allocation2 + $0x40] sm:$0xff]
        %v743 = vld [vmem:[#allocation2 + $0x48] sm:$0xff]
        %v744 = vld [vmem:[#allocation2 + $0x50] sm:$0xff]
        %v745 = vld [vmem:[#allocation2 + $0x58] sm:$0xff]
        %v746 = vld [vmem:[#allocation2 + $0x60] sm:$0xff]
        %v747 = vld [vmem:[#allocation2 + $0x68] sm:$0xff]
        %v748 = vld [vmem:[#allocation2 + $0x70] sm:$0xff]
        %v749 = vld [vmem:[#allocation2 + $0x78] sm:$0xff]
        %v750 = vld [vmem:[#allocation2 + $0x80] sm:$0xff]
        %v751 = vld [vmem:[#allocation2 + $0x88] sm:$0xff]
        %v752 = vld [vmem:[#allocation2 + $0x90] sm:$0xff]
        %v753 = vld [vmem:[#allocation2 + $0x98] sm:$0xff]
        %v754 = vld [vmem:[#allocation2 + $0xa0] sm:$0xff]
        %v755 = vld [vmem:[#allocation2 + $0xa8] sm:$0xff]
        %v756 = vld [vmem:[#allocation2 + $0xb0] sm:$0xff]
        %v757 = vld [vmem:[#allocation2 + $0xb8] sm:$0xff]
        %v758 = vld [vmem:[#allocation2 + $0xc0] sm:$0xff]
        %v759 = vld [vmem:[#allocation2 + $0xc8] sm:$0xff]
        %v760 = vld [vmem:[#allocation2 + $0xd0] sm:$0xff]
        %v761 = vld [vmem:[#allocation2 + $0xd8] sm:$0xff]
        %v762 = vld [vmem:[#allocation2 + $0xe0] sm:$0xff]
        %v763 = vld [vmem:[#allocation2 + $0xe8] sm:$0xff]
        %v764 = vld [vmem:[#allocation2 + $0xf0] sm:$0xff]
        %v765 = vld [vmem:[#allocation2 + $0xf8] sm:$0xff]
        %v766 = vld [vmem:[%s213] sm:$0x1]
        %v768 = vperm.slane %v766, 0
        %v770 = vadd.f32 %v734, %v768
        %v771 = vadd.f32 %v735, %v768
        %v772 = vadd.f32 %v736, %v768
        %v773 = vadd.f32 %v737, %v768
        %v774 = vadd.f32 %v738, %v768
        %v775 = vadd.f32 %v739, %v768
        %v776 = vadd.f32 %v740, %v768
        %v777 = vadd.f32 %v741, %v768
        %v778 = vadd.f32 %v742, %v768
        %v779 = vadd.f32 %v743, %v768
        %v780 = vadd.f32 %v744, %v768
        %v781 = vadd.f32 %v745, %v768
        %v782 = vadd.f32 %v746, %v768
        %v783 = vadd.f32 %v747, %v768
        %v784 = vadd.f32 %v748, %v768
        %v785 = vadd.f32 %v749, %v768
        %v786 = vadd.f32 %v750, %v768
        %v787 = vadd.f32 %v751, %v768
        %v788 = vadd.f32 %v752, %v768
        %v789 = vadd.f32 %v753, %v768
        %v790 = vadd.f32 %v754, %v768
        %v791 = vadd.f32 %v755, %v768
        %v792 = vadd.f32 %v756, %v768
        %v793 = vadd.f32 %v757, %v768
        %v794 = vadd.f32 %v758, %v768
        %v795 = vadd.f32 %v759, %v768
        %v796 = vadd.f32 %v760, %v768
        %v797 = vadd.f32 %v761, %v768
        %v798 = vadd.f32 %v762, %v768
        %v799 = vadd.f32 %v763, %v768
        %v800 = vadd.f32 %v764, %v768
        %v801 = vadd.f32 %v765, %v768
        %v802 = vmax.f32 %v770, 0.0
        %v803 = vmax.f32 %v771, 0.0
        %v804 = vmax.f32 %v772, 0.0
        %v805 = vmax.f32 %v773, 0.0
        %v806 = vmax.f32 %v774, 0.0
        %v807 = vmax.f32 %v775, 0.0
        %v808 = vmax.f32 %v776, 0.0
        %v809 = vmax.f32 %v777, 0.0
        %v810 = vmax.f32 %v778, 0.0
        %v811 = vmax.f32 %v779, 0.0
        %v812 = vmax.f32 %v780, 0.0
        %v813 = vmax.f32 %v781, 0.0
        %v814 = vmax.f32 %v782, 0.0
        %v815 = vmax.f32 %v783, 0.0
        %v816 = vmax.f32 %v784, 0.0
        %v817 = vmax.f32 %v785, 0.0
        %v818 = vmax.f32 %v786, 0.0
        %v819 = vmax.f32 %v787, 0.0
        %v820 = vmax.f32 %v788, 0.0
        %v821 = vmax.f32 %v789, 0.0
        %v822 = vmax.f32 %v790, 0.0
        %v823 = vmax.f32 %v791, 0.0
        %v824 = vmax.f32 %v792, 0.0
        %v825 = vmax.f32 %v793, 0.0
        %v826 = vmax.f32 %v794, 0.0
        %v827 = vmax.f32 %v795, 0.0
        %v828 = vmax.f32 %v796, 0.0
        %v829 = vmax.f32 %v797, 0.0
        %v830 = vmax.f32 %v798, 0.0
        %v831 = vmax.f32 %v799, 0.0
        %v832 = vmax.f32 %v800, 0.0
        %v833 = vmax.f32 %v801, 0.0
        %v834 = vpack.c.bf16 %v802, %v802
        %v835 = vpack.c.bf16 %v803, %v803
        %v836 = vpack.c.bf16 %v804, %v804
        %v837 = vpack.c.bf16 %v805, %v805
        %v838 = vpack.c.bf16 %v806, %v806
        %v839 = vpack.c.bf16 %v807, %v807
        %v840 = vpack.c.bf16 %v808, %v808
        %v841 = vpack.c.bf16 %v809, %v809
        %v842 = vpack.c.bf16 %v810, %v810
        %v843 = vpack.c.bf16 %v811, %v811
        %v844 = vpack.c.bf16 %v812, %v812
        %v845 = vpack.c.bf16 %v813, %v813
        %v846 = vpack.c.bf16 %v814, %v814
        %v847 = vpack.c.bf16 %v815, %v815
        %v848 = vpack.c.bf16 %v816, %v816
        %v849 = vpack.c.bf16 %v817, %v817
        %v850 = vpack.c.bf16 %v818, %v818
        %v851 = vpack.c.bf16 %v819, %v819
        %v852 = vpack.c.bf16 %v820, %v820
        %v853 = vpack.c.bf16 %v821, %v821
        %v854 = vpack.c.bf16 %v822, %v822
        %v855 = vpack.c.bf16 %v823, %v823
        %v856 = vpack.c.bf16 %v824, %v824
        %v857 = vpack.c.bf16 %v825, %v825
        %v858 = vpack.c.bf16 %v826, %v826
        %v859 = vpack.c.bf16 %v827, %v827
        %v860 = vpack.c.bf16 %v828, %v828
        %v861 = vpack.c.bf16 %v829, %v829
        %v862 = vpack.c.bf16 %v830, %v830
        %v863 = vpack.c.bf16 %v831, %v831
        %v864 = vpack.c.bf16 %v832, %v832
        %v865 = vpack.c.bf16 %v833, %v833
        %vm866 = vcmask 519168
        %867 = vst.msk [vmem:[%s201] sm:$0xf] %vm866, %v834
        %868 = vst.msk [vmem:[%s201 + $0x4] sm:$0xf] %vm866, %v835
        %869 = vst.msk [vmem:[%s201 + $0x8] sm:$0xf] %vm866, %v836
        %870 = vst.msk [vmem:[%s201 + $0xc] sm:$0xf] %vm866, %v837
        %871 = vst.msk [vmem:[%s201 + $0x10] sm:$0xf] %vm866, %v838
        %872 = vst.msk [vmem:[%s201 + $0x14] sm:$0xf] %vm866, %v839
        %873 = vst.msk [vmem:[%s201 + $0x18] sm:$0xf] %vm866, %v840
        %874 = vst.msk [vmem:[%s201 + $0x1c] sm:$0xf] %vm866, %v841
        %875 = vst.msk [vmem:[%s201 + $0x20] sm:$0xf] %vm866, %v842
        %876 = vst.msk [vmem:[%s201 + $0x24] sm:$0xf] %vm866, %v843
        %877 = vst.msk [vmem:[%s201 + $0x28] sm:$0xf] %vm866, %v844
        %878 = vst.msk [vmem:[%s201 + $0x2c] sm:$0xf] %vm866, %v845
        %879 = vst.msk [vmem:[%s201 + $0x30] sm:$0xf] %vm866, %v846
        %880 = vst.msk [vmem:[%s201 + $0x34] sm:$0xf] %vm866, %v847
        %881 = vst.msk [vmem:[%s201 + $0x38] sm:$0xf] %vm866, %v848
        %882 = vst.msk [vmem:[%s201 + $0x3c] sm:$0xf] %vm866, %v849
        %883 = vst.msk [vmem:[%s201 + $0x40] sm:$0xf] %vm866, %v850
        %884 = vst.msk [vmem:[%s201 + $0x44] sm:$0xf] %vm866, %v851
        %885 = vst.msk [vmem:[%s201 + $0x48] sm:$0xf] %vm866, %v852
        %886 = vst.msk [vmem:[%s201 + $0x4c] sm:$0xf] %vm866, %v853
        %887 = vst.msk [vmem:[%s201 + $0x50] sm:$0xf] %vm866, %v854
        %888 = vst.msk [vmem:[%s201 + $0x54] sm:$0xf] %vm866, %v855
        %889 = vst.msk [vmem:[%s201 + $0x58] sm:$0xf] %vm866, %v856
        %890 = vst.msk [vmem:[%s201 + $0x5c] sm:$0xf] %vm866, %v857
        %891 = vst.msk [vmem:[%s201 + $0x60] sm:$0xf] %vm866, %v858
        %892 = vst.msk [vmem:[%s201 + $0x64] sm:$0xf] %vm866, %v859
        %893 = vst.msk [vmem:[%s201 + $0x68] sm:$0xf] %vm866, %v860
        %894 = vst.msk [vmem:[%s201 + $0x6c] sm:$0xf] %vm866, %v861
        %895 = vst.msk [vmem:[%s201 + $0x70] sm:$0xf] %vm866, %v862
        %896 = vst.msk [vmem:[%s201 + $0x74] sm:$0xf] %vm866, %v863
        %897 = vst.msk [vmem:[%s201 + $0x78] sm:$0xf] %vm866, %v864
        %898 = vst.msk [vmem:[%s201 + $0x7c] sm:$0xf] %vm866, %v865
        %s899 = sand.u32 %s117, 1
        %s900 = scalar_lea.sflag [#allocation4], %s899
        %s901 = sand.u32 %s117, 1
        %s902 = smul.addr %s901, 128
        %s903 = scalar_lea.vmem [#allocation3], %s902
        // Predicated region
        $region33: #{conv_bn_act.1} parent=31 // pred_check
          %p904 = pneg %p127
        $region34: #{conv_bn_act.1} parent=31 // pred_check_branch
          %906 = sbr.rel (%p904) target = $region36
        $region35: #{conv_bn_act.1} parent=31 // pred_region
          %908 = vsyncadd %s900, 0
          %s909 = smul.addr %s21, 32
          %s910 = sadd.s32 %s22, %s909
          %s911 = smul.addr %s910, 4
          %s912 = scalar_lea.hbm %s3, %s911
          %s913 = sshll.u32 %s903, 4
          %s914 = int_to_ptr.vmem [resolvable:$true] %s913
          %s915 = sshll.u32 %s912, 4
          %s916 = int_to_ptr.hbm [resolvable:$true] %s915
          %921 = dma.vmem_to_hbm [thread:$0]  %s914, 2048, %s916, %s900, 64, 64, 4
        $region36: #{conv_bn_act.1} parent=31 // pred_fallthru
          _
      $region32: #{conv_bn_act.1} parent=5 // pred_fallthru
        _
      %p922 = scmp.le.s32.totalorder 2, %s12
      // Predicated region
      $region37: #{conv_bn_act.1} parent=5 // pred_check
        %p923 = pneg %p922
      $region38: #{conv_bn_act.1} parent=5 // pred_check_branch
        %925 = sbr.rel (%p923) target = $region40
      $region39: #{conv_bn_act.1} parent=5 // pred_region
        %s926 = ssub.s32 %s12, 2
        // Predicated region
        $region41: #{conv_bn_act.1} parent=39 // pred_check
          %p927 = pneg %p133
        $region42: #{conv_bn_act.1} parent=39 // pred_check_branch
          %929 = sbr.rel (%p927) target = $region44
        $region43: #{conv_bn_act.1} parent=39 // pred_region
          %s930 = sand.u32 %s118, 1
          %s931 = scalar_lea.sflag [#allocation4], %s930
          %s932 = sand.u32 %s118, 1
          %s933 = smul.addr %s932, 128
          %s934 = scalar_lea.vmem [#allocation3], %s933
          %936 = dma.done %s931, 2048
        $region44: #{conv_bn_act.1} parent=39 // pred_fallthru
          _
      $region40: #{conv_bn_act.1} parent=5 // pred_fallthru
        _
    $region6: #{conv_bn_act.1} parent=1 // loop_footer
      %s16 = sadd.s32 1, %s12
    $region7: #{conv_bn_act.1} parent=1 // loop_footer_branch
      %11 = sbr.rel target = $region3
    $region8: #{conv_bn_act.1} parent=1 // loop_exit
      _
    %937 = vsyncpa [#allocation4], 1
    %s938 = scalar_lea.sflag [#allocation4], 1
    %939 = vsyncpa %s938, 1

</llo_original>
